<compile_context>
chip_gen: v7x
topology: tpu7x:2x2x1
jax: 0.10.0
libtpu: 0.0.40
codegen_flags: <defaults>
</compile_context>

<pallas_src>
import functools

import jax
import jax.numpy as jnp
from jax.experimental import pallas as pl
from jax.experimental.pallas import tpu as pltpu


def _link_layer_kernel(src_ref, dst_ref, dtu_ref, dtv_ref,
                       w1eT_ref, w1t_ref, b1_ref,
                       w2u_ref, w2v_ref, b2_ref,
                       out_ref):
    """One (TILE_N, D) tile of the fused LinkLayer forward.

    src_ref, dst_ref : (TILE_N, D)  node-embedding tiles (native dtype)
    dtu_ref, dtv_ref : (TILE_N, 1)  time deltas (t - src_t), (t - dst_t), f32
    w1eT_ref         : (D, D)       fc1 weight, embedding block, pre-transposed (in, out)
    w1t_ref          : (1, D)       fc1 weight, time column (as a lane row)
    b1_ref           : (1, D)       fc1 bias
    w2u_ref, w2v_ref : (1, D)       fc weight split for [emb_u | emb_v]
    b2_ref           : (1,)         fc bias (SMEM scalar)
    out_ref          : (TILE_N, 1)  logits tile
    """
    src = src_ref[...]
    dst = dst_ref[...]
    w1eT = w1eT_ref[...]
    w1t = w1t_ref[...]
    b1 = b1_ref[...]

    # TimeEncodingLayer('concat'):  ReLU([x, dt] @ W1^T + b1)
    #   == ReLU(x @ W1_emb^T + dt * w1_t + b1)
    # (W1_emb^T is pre-transposed in the wrapper -> plain MXU matmul here.)
    pre_u = (jnp.dot(src, w1eT, preferred_element_type=jnp.float32)
             + dtu_ref[...] * w1t + b1)
    pre_v = (jnp.dot(dst, w1eT, preferred_element_type=jnp.float32)
             + dtv_ref[...] * w1t + b1)
    emb_u = jnp.maximum(pre_u, 0.0)
    emb_v = jnp.maximum(pre_v, 0.0)

    # Dropout is identity in eval mode.
    # fc: concat([emb_u, emb_v]) @ W2^T + b2
    #   == sum(emb_u * w2_u + emb_v * w2_v, lanes) + b2
    # VPU mul + XLU lane-reduce; avoids two 1-column MXU passes + transposes.
    logits = (jnp.sum(emb_u * w2u_ref[...] + emb_v * w2v_ref[...],
                      axis=-1, keepdims=True)
              + b2_ref[0])
    out_ref[...] = logits.astype(out_ref.dtype)


def link_layer_forward(src_emb, dst_emb, src_t, dst_t, t, params,
                       *, tile_n=1024):
    """Wrapper: splits the params, pads N, and launches the gridded kernel."""
    n, d = src_emb.shape
    emb_dtype = src_emb.dtype

    dt_u = (t - src_t).reshape(n, 1).astype(jnp.float32)
    dt_v = (t - dst_t).reshape(n, 1).astype(jnp.float32)

    # One-time wrapper-side parameter plumbing (concat split + transpose).
    w1eT = params["w1"][:, :d].T.astype(emb_dtype)          # (D_in, D_out)
    w1t = params["w1"][:, d:].reshape(1, d).astype(jnp.float32)
    b1 = params["b1"].reshape(1, d).astype(jnp.float32)
    w2u = params["w2"][:, :d].reshape(1, d).astype(jnp.float32)
    w2v = params["w2"][:, d:].reshape(1, d).astype(jnp.float32)
    b2 = params["b2"].reshape(1).astype(jnp.float32)

    # Tile the edge dimension; pad N to a multiple of TILE_N (TILE_N % 8 == 0).
    def round_up(x, m):
        return ((x + m - 1) // m) * m

    tile_n = max(8, min(round_up(tile_n, 8), round_up(n, 8)))
    n_pad = round_up(n, tile_n)
    if n_pad != n:
        pad = ((0, n_pad - n), (0, 0))
        src_emb = jnp.pad(src_emb, pad)
        dst_emb = jnp.pad(dst_emb, pad)
        dt_u = jnp.pad(dt_u, pad)
        dt_v = jnp.pad(dt_v, pad)

    grid = (n_pad // tile_n,)
    row_spec = pl.BlockSpec((tile_n, d), lambda i: (i, 0))
    col_spec = pl.BlockSpec((tile_n, 1), lambda i: (i, 0))

    def resident(shape):
        # Weight/bias blocks: constant index_map -> stay in VMEM across steps.
        return pl.BlockSpec(shape, lambda i: (0, 0))

    out = pl.pallas_call(
        _link_layer_kernel,
        out_shape=jax.ShapeDtypeStruct((n_pad, 1), jnp.float32),
        grid=grid,
        in_specs=[
            row_spec, row_spec,                     # src_emb, dst_emb
            col_spec, col_spec,                     # dt_u, dt_v
            resident((d, d)),                       # w1eT
            resident((1, d)), resident((1, d)),     # w1t, b1
            resident((1, d)), resident((1, d)),     # w2u, w2v
            pl.BlockSpec(memory_space=pltpu.MemorySpace.SMEM),  # b2 scalar
        ],
        out_specs=col_spec,
        compiler_params=pltpu.CompilerParams(
            dimension_semantics=("parallel",),      # shard rows across TCs (v7x)
            vmem_limit_bytes=48 * 1024 * 1024,      # safe on v5e/v6e/v7x
        ),
    )(src_emb, dst_emb, dt_u, dt_v, w1eT, w1t, b1, w2u, w2v, b2)

    return out[:n, 0]   # drop padding rows; logits.squeeze()


def reference_forward(src_emb, dst_emb, src_t, dst_t, t, params):
    """Pure-JAX reference mirroring the PyTorch forward (eval mode)."""
    dt_u = (t - src_t)[:, None]
    dt_v = (t - dst_t)[:, None]
    xu = jnp.concatenate([src_emb, dt_u], axis=-1)
    xv = jnp.concatenate([dst_emb, dt_v], axis=-1)
    emb_u = jax.nn.relu(xu @ params["w1"].T + params["b1"])
    emb_v = jax.nn.relu(xv @ params["w1"].T + params["b1"])
    x = jnp.concatenate([emb_u, emb_v], axis=1)
    return (x @ params["w2"].T + params["b2"]).squeeze()


def init_params(key, in_features):
    """Deterministic parameter init (xavier-normal-ish for fc1, uniform for fc)."""
    d = in_features
    k1, k2, k3, k4 = jax.random.split(key, 4)
    std1 = (2.0 / (d + 1 + d)) ** 0.5
    w1 = std1 * jax.random.normal(k1, (d, d + 1), dtype=jnp.float32)     # fc1.weight (out, in+1)
    b1 = 0.01 * jax.random.normal(k2, (d,), dtype=jnp.float32)           # fc1.bias
    bound = 1.0 / (2 * d) ** 0.5
    w2 = jax.random.uniform(k3, (1, 2 * d), jnp.float32, -bound, bound)  # fc.weight (1, 2D)
    b2 = jax.random.uniform(k4, (1,), jnp.float32, -bound, bound)        # fc.bias
    return {"w1": w1, "b1": b1, "w2": w2, "b2": b2}


def _make_inputs(key, n, d):
    ks, kd, kt1, kt2, kt3 = jax.random.split(key, 5)
    src_emb = jax.random.normal(ks, (n, d), dtype=jnp.float32)
    dst_emb = jax.random.normal(kd, (n, d), dtype=jnp.float32)
    src_t = jax.random.uniform(kt1, (n,), jnp.float32, 0.0, 10.0)
    dst_t = jax.random.uniform(kt2, (n,), jnp.float32, 0.0, 10.0)
    t = jax.random.uniform(kt3, (n,), jnp.float32, 10.0, 20.0)
    return src_emb, dst_emb, src_t, dst_t, t


if __name__ == "__main__":
    key = jax.random.PRNGKey(0)
    kp, k_small, k_big = jax.random.split(key, 3)

    # Primary small test: 8 edges, in_features=32.
    N, D = 8, 32
    params = init_params(kp, D)
    src_emb, dst_emb, src_t, dst_t, t = _make_inputs(k_small, N, D)

    logits = link_layer_forward(src_emb, dst_emb, src_t, dst_t, t, params)
    jax.block_until_ready(logits)
    ref = reference_forward(src_emb, dst_emb, src_t, dst_t, t, params)
    assert logits.shape == (N,)
    assert jnp.allclose(logits, ref, atol=1e-5, rtol=1e-5), (logits, ref)

    # Secondary test: ragged N with a multi-step grid (exercises padding + pipeline).
    N2 = 300
    src2, dst2, st2, dt2, t2 = _make_inputs(k_big, N2, D)
    logits2 = link_layer_forward(src2, dst2, st2, dt2, t2, params, tile_n=128)
    jax.block_until_ready(logits2)
    ref2 = reference_forward(src2, dst2, st2, dt2, t2, params)
    assert logits2.shape == (N2,)
    assert jnp.allclose(logits2, ref2, atol=1e-5, rtol=1e-5)

    print("KERNEL_OK")
</pallas_src>

<mosaic_0001>
module attributes {stable_mosaic.version = 11 : i64} {
  func.func @_link_layer_kernel(%arg0: i32, %arg1: memref<8x32xf32, #tpu.memory_space<vmem>>, %arg2: memref<8x32xf32, #tpu.memory_space<vmem>>, %arg3: memref<8x1xf32, #tpu.memory_space<vmem>>, %arg4: memref<8x1xf32, #tpu.memory_space<vmem>>, %arg5: memref<32x32xf32, #tpu.memory_space<vmem>>, %arg6: memref<1x32xf32, #tpu.memory_space<vmem>>, %arg7: memref<1x32xf32, #tpu.memory_space<vmem>>, %arg8: memref<1x32xf32, #tpu.memory_space<vmem>>, %arg9: memref<1x32xf32, #tpu.memory_space<vmem>>, %arg10: memref<1xf32, #tpu.memory_space<smem>>, %arg11: memref<8x1xf32, #tpu.memory_space<vmem>>) attributes {dimension_semantics = [#tpu.dimension_semantics<parallel>], iteration_bounds = array<i64: 1>, scalar_prefetch = 0 : i64, scratch_operands = 0 : i64, tpu.core_type = #tpu.core_type<tc>, window_params = [{transform_indices = @transform_0, window_bounds = array<i64: 8, 32>}, {transform_indices = @transform_1, window_bounds = array<i64: 8, 32>}, {transform_indices = @transform_2, window_bounds = array<i64: 8, 1>}, {transform_indices = @transform_3, window_bounds = array<i64: 8, 1>}, {pipeline_mode = #tpu.pipeline_mode<synchronous>, transform_indices = @transform_4, window_bounds = array<i64: 32, 32>}, {pipeline_mode = #tpu.pipeline_mode<synchronous>, transform_indices = @transform_5, window_bounds = array<i64: 1, 32>}, {pipeline_mode = #tpu.pipeline_mode<synchronous>, transform_indices = @transform_6, window_bounds = array<i64: 1, 32>}, {pipeline_mode = #tpu.pipeline_mode<synchronous>, transform_indices = @transform_7, window_bounds = array<i64: 1, 32>}, {pipeline_mode = #tpu.pipeline_mode<synchronous>, transform_indices = @transform_8, window_bounds = array<i64: 1, 32>}, {transform_indices = @transform_9, window_bounds = array<i64: 1>}, {transform_indices = @transform_10, window_bounds = array<i64: 8, 1>}]} {
    %c0 = arith.constant 0 : index
    %c0_0 = arith.constant 0 : index
    %0 = vector.load %arg1[%c0, %c0_0] : memref<8x32xf32, #tpu.memory_space<vmem>>, vector<8x32xf32>
    %c0_1 = arith.constant 0 : index
    %c0_2 = arith.constant 0 : index
    %1 = vector.load %arg2[%c0_1, %c0_2] : memref<8x32xf32, #tpu.memory_space<vmem>>, vector<8x32xf32>
    %c0_3 = arith.constant 0 : index
    %c0_4 = arith.constant 0 : index
    %2 = vector.load %arg5[%c0_3, %c0_4] : memref<32x32xf32, #tpu.memory_space<vmem>>, vector<32x32xf32>
    %c0_5 = arith.constant 0 : index
    %c0_6 = arith.constant 0 : index
    %3 = vector.load %arg6[%c0_5, %c0_6] : memref<1x32xf32, #tpu.memory_space<vmem>>, vector<1x32xf32>
    %c0_7 = arith.constant 0 : index
    %c0_8 = arith.constant 0 : index
    %4 = vector.load %arg7[%c0_7, %c0_8] : memref<1x32xf32, #tpu.memory_space<vmem>>, vector<1x32xf32>
    %cst = arith.constant dense<0.000000e+00> : vector<8x32xf32>
    %5 = tpu.matmul %0, %2, %cst {dimension_numbers = #tpu.dot_dimension_numbers<[1], [0], [0], [1], [0, 0, 1, 1], [], []>} : vector<8x32xf32>, vector<32x32xf32>, vector<8x32xf32> -> vector<8x32xf32>
    %c0_9 = arith.constant 0 : index
    %c0_10 = arith.constant 0 : index
    %6 = vector.load %arg3[%c0_9, %c0_10] : memref<8x1xf32, #tpu.memory_space<vmem>>, vector<8x1xf32>
    %7 = vector.broadcast %6 : vector<8x1xf32> to vector<8x32xf32>
    %8 = vector.broadcast %3 : vector<1x32xf32> to vector<8x32xf32>
    %9 = arith.mulf %7, %8 : vector<8x32xf32>
    %10 = arith.addf %5, %9 : vector<8x32xf32>
    %11 = vector.broadcast %4 : vector<1x32xf32> to vector<8x32xf32>
    %12 = arith.addf %10, %11 : vector<8x32xf32>
    %cst_11 = arith.constant dense<0.000000e+00> : vector<8x32xf32>
    %13 = tpu.matmul %1, %2, %cst_11 {dimension_numbers = #tpu.dot_dimension_numbers<[1], [0], [0], [1], [0, 0, 1, 1], [], []>} : vector<8x32xf32>, vector<32x32xf32>, vector<8x32xf32> -> vector<8x32xf32>
    %c0_12 = arith.constant 0 : index
    %c0_13 = arith.constant 0 : index
    %14 = vector.load %arg4[%c0_12, %c0_13] : memref<8x1xf32, #tpu.memory_space<vmem>>, vector<8x1xf32>
    %15 = vector.broadcast %14 : vector<8x1xf32> to vector<8x32xf32>
    %16 = vector.broadcast %3 : vector<1x32xf32> to vector<8x32xf32>
    %17 = arith.mulf %15, %16 : vector<8x32xf32>
    %18 = arith.addf %13, %17 : vector<8x32xf32>
    %19 = vector.broadcast %4 : vector<1x32xf32> to vector<8x32xf32>
    %20 = arith.addf %18, %19 : vector<8x32xf32>
    %cst_14 = arith.constant 0.000000e+00 : f32
    %21 = vector.broadcast %cst_14 : f32 to vector<8x32xf32>
    %22 = arith.maximumf %12, %21 : vector<8x32xf32>
    %cst_15 = arith.constant 0.000000e+00 : f32
    %23 = vector.broadcast %cst_15 : f32 to vector<8x32xf32>
    %24 = arith.maximumf %20, %23 : vector<8x32xf32>
    %c0_16 = arith.constant 0 : index
    %c0_17 = arith.constant 0 : index
    %25 = vector.load %arg8[%c0_16, %c0_17] : memref<1x32xf32, #tpu.memory_space<vmem>>, vector<1x32xf32>
    %26 = vector.broadcast %25 : vector<1x32xf32> to vector<8x32xf32>
    %27 = arith.mulf %22, %26 : vector<8x32xf32>
    %c0_18 = arith.constant 0 : index
    %c0_19 = arith.constant 0 : index
    %28 = vector.load %arg9[%c0_18, %c0_19] : memref<1x32xf32, #tpu.memory_space<vmem>>, vector<1x32xf32>
    %29 = vector.broadcast %28 : vector<1x32xf32> to vector<8x32xf32>
    %30 = arith.mulf %24, %29 : vector<8x32xf32>
    %31 = arith.addf %27, %30 : vector<8x32xf32>
    %cst_20 = arith.constant dense<0.000000e+00> : vector<8xf32>
    %32 = vector.multi_reduction <add>, %31, %cst_20 [1] : vector<8x32xf32> to vector<8xf32>
    %33 = vector.shape_cast %32 : vector<8xf32> to vector<8x1xf32>
    %c0_21 = arith.constant 0 : index
    %34 = memref.load %arg10[%c0_21] : memref<1xf32, #tpu.memory_space<smem>>
    %35 = vector.broadcast %34 : f32 to vector<8x1xf32>
    %36 = arith.addf %33, %35 : vector<8x1xf32>
    %c0_22 = arith.constant 0 : index
    %c0_23 = arith.constant 0 : index
    %37 = vector.load %arg11[%c0_22, %c0_23] : memref<8x1xf32, #tpu.memory_space<vmem>>, vector<8x1xf32>
    tpu.vector_store %arg11[%c0_22, %c0_23], %36 {strides = array<i32>} : memref<8x1xf32, #tpu.memory_space<vmem>>, vector<8x1xf32>,
    return
  }
  func.func @transform_0(%arg0: i32) -> (i32, i32) {
    %c0_i32 = arith.constant 0 : i32
    %c0_i32_0 = arith.constant 0 : i32
    return %arg0, %c0_i32 : i32, i32
  }
  func.func @transform_1(%arg0: i32) -> (i32, i32) {
    %c0_i32 = arith.constant 0 : i32
    %c0_i32_0 = arith.constant 0 : i32
    return %arg0, %c0_i32 : i32, i32
  }
  func.func @transform_2(%arg0: i32) -> (i32, i32) {
    %c0_i32 = arith.constant 0 : i32
    %c0_i32_0 = arith.constant 0 : i32
    return %arg0, %c0_i32 : i32, i32
  }
  func.func @transform_3(%arg0: i32) -> (i32, i32) {
    %c0_i32 = arith.constant 0 : i32
    %c0_i32_0 = arith.constant 0 : i32
    return %arg0, %c0_i32 : i32, i32
  }
  func.func @transform_4(%arg0: i32) -> (i32, i32) {
    %c0_i32 = arith.constant 0 : i32
    %c0_i32_0 = arith.constant 0 : i32
    %c0_i32_1 = arith.constant 0 : i32
    return %c0_i32, %c0_i32_0 : i32, i32
  }
  func.func @transform_5(%arg0: i32) -> (i32, i32) {
    %c0_i32 = arith.constant 0 : i32
    %c0_i32_0 = arith.constant 0 : i32
    %c0_i32_1 = arith.constant 0 : i32
    return %c0_i32, %c0_i32_0 : i32, i32
  }
  func.func @transform_6(%arg0: i32) -> (i32, i32) {
    %c0_i32 = arith.constant 0 : i32
    %c0_i32_0 = arith.constant 0 : i32
    %c0_i32_1 = arith.constant 0 : i32
    return %c0_i32, %c0_i32_0 : i32, i32
  }
  func.func @transform_7(%arg0: i32) -> (i32, i32) {
    %c0_i32 = arith.constant 0 : i32
    %c0_i32_0 = arith.constant 0 : i32
    %c0_i32_1 = arith.constant 0 : i32
    return %c0_i32, %c0_i32_0 : i32, i32
  }
  func.func @transform_8(%arg0: i32) -> (i32, i32) {
    %c0_i32 = arith.constant 0 : i32
    %c0_i32_0 = arith.constant 0 : i32
    %c0_i32_1 = arith.constant 0 : i32
    return %c0_i32, %c0_i32_0 : i32, i32
  }
  func.func @transform_9(%arg0: i32) -> i32 {
    %c0_i32 = arith.constant 0 : i32
    %c0_i32_0 = arith.constant 0 : i32
    return %c0_i32 : i32
  }
  func.func @transform_10(%arg0: i32) -> (i32, i32) {
    %c0_i32 = arith.constant 0 : i32
    %c0_i32_0 = arith.constant 0 : i32
    return %arg0, %c0_i32 : i32, i32
  }
}

</mosaic_0001>

<llo_original>
// kernel: tpu_custom_call.1
$region0: #{tpu_custom_call.1}
  #allocation0 [shape = 'u32[]', space=smem, size = 0x4, offset = 0x4, fixed_abs, tag = 'smem constant byte address 0x4 - core index']
  #allocation1 [shape = 'u32[144,128]{1,0:T(1,128)}', space=vmem, size = 0x12000, scoped, tag = 'internal scratch']
  #allocation2 [shape = 'f32[1]{0:T(128)S(6)}', space=smem, size = 0x200, scoped, tag = 'scoped memory for tpu_custom_call.1']
  %s0 = inlined_call_operand.hbm [shape: f32[8,32], index: 0, kind: input, shape index: {}]
  %s1 = inlined_call_operand.hbm [shape: f32[8,32], index: 1, kind: input, shape index: {}]
  %s2 = inlined_call_operand.vmem [shape: f32[8,1], index: 2, kind: input, shape index: {}]
  %s3 = inlined_call_operand.vmem [shape: f32[8,1], index: 3, kind: input, shape index: {}]
  %s4 = inlined_call_operand.vmem [shape: f32[32,32], index: 4, kind: input, shape index: {}]
  %s5 = inlined_call_operand.vmem [shape: f32[1,32], index: 5, kind: input, shape index: {}]
  %s6 = inlined_call_operand.vmem [shape: f32[1,32], index: 6, kind: input, shape index: {}]
  %s7 = inlined_call_operand.vmem [shape: f32[1,32], index: 7, kind: input, shape index: {}]
  %s8 = inlined_call_operand.vmem [shape: f32[1,32], index: 8, kind: input, shape index: {}]
  %s9 = inlined_call_operand.<no memory space> [shape: f32[1], index: 9, kind: input, shape index: {}]
  %s10 = inlined_call_operand.vmem [shape: f32[8,1], index: 10, kind: output, shape index: {}]
  %s11 = sld [smem:[#allocation0]]
  $region58: #{tpu_custom_call.1} parent=0
    _
  %s13 = ssub.s32 1, %s11
  %s14 = scalar_select 0, %s13, %s11
  %15 = sst [smem:[#allocation2]] %s9
  $region1: #{tpu_custom_call.1} parent=0
    #allocation3 [shape = 'u8[4096]{0}', space=vmem, size = 0x1000, scoped, tag = 'input window, operand 0, single buffered']
    #allocation4 [shape = 's32[1]{0}', space=sflag, size = 0x4, scoped, tag = 'scoped memory for tpu_custom_call.1']
    #allocation5 [shape = 'u8[4096]{0}', space=vmem, size = 0x1000, scoped, tag = 'input window, operand 1, single buffered']
    #allocation6 [shape = 's32[1]{0}', space=sflag, size = 0x4, scoped, tag = 'scoped memory for tpu_custom_call.1']
    %16 = vsyncpa [#allocation4], 0
    %17 = vsyncpa [#allocation6], 0
    // Predicated region
    $region2: #{tpu_custom_call.1} parent=1 // pred_check
      _
    $region3: #{tpu_custom_call.1} parent=1 // pred_check_branch
      %19 = sbr.rel (0) target = $region5
    $region4: #{tpu_custom_call.1} parent=1 // pred_region
      %s21 = ssub.s32 128, 128
      %22 = vsyncadd [#allocation4], %s21
      %s24 = sshll.u32 [#allocation3], 4
      %s25 = int_to_ptr.vmem [resolvable:$true] %s24
      %27 = dma.hbm_to_vmem [thread:$0]  %s0, 128, %s25, [#allocation4]
    $region5: #{tpu_custom_call.1} parent=1 // pred_fallthru
      _
    // Predicated region
    $region6: #{tpu_custom_call.1} parent=1 // pred_check
      _
    $region7: #{tpu_custom_call.1} parent=1 // pred_check_branch
      %29 = sbr.rel (0) target = $region9
    $region8: #{tpu_custom_call.1} parent=1 // pred_region
      %s31 = ssub.s32 128, 128
      %32 = vsyncadd [#allocation6], %s31
      %s34 = sshll.u32 [#allocation5], 4
      %s35 = int_to_ptr.vmem [resolvable:$true] %s34
      %37 = dma.hbm_to_vmem [thread:$0]  %s1, 128, %s35, [#allocation6]
    $region9: #{tpu_custom_call.1} parent=1 // pred_fallthru
      _
    // Predicated region
    $region10: #{tpu_custom_call.1} parent=1 // pred_check
      _
    $region11: #{tpu_custom_call.1} parent=1 // pred_check_branch
      %39 = sbr.rel (0) target = $region13
    $region12: #{tpu_custom_call.1} parent=1 // pred_region
      _
    $region13: #{tpu_custom_call.1} parent=1 // pred_fallthru
      _
    // Predicated region
    $region14: #{tpu_custom_call.1} parent=1 // pred_check
      _
    $region15: #{tpu_custom_call.1} parent=1 // pred_check_branch
      %41 = sbr.rel (0) target = $region17
    $region16: #{tpu_custom_call.1} parent=1 // pred_region
      _
    $region17: #{tpu_custom_call.1} parent=1 // pred_fallthru
      _
    // Predicated region
    $region18: #{tpu_custom_call.1} parent=1 // pred_check
      _
    $region19: #{tpu_custom_call.1} parent=1 // pred_check_branch
      %43 = sbr.rel (0) target = $region21
    $region20: #{tpu_custom_call.1} parent=1 // pred_region
      _
    $region21: #{tpu_custom_call.1} parent=1 // pred_fallthru
      _
    // Predicated region
    $region22: #{tpu_custom_call.1} parent=1 // pred_check
      _
    $region23: #{tpu_custom_call.1} parent=1 // pred_check_branch
      %45 = sbr.rel (0) target = $region25
    $region24: #{tpu_custom_call.1} parent=1 // pred_region
      _
    $region25: #{tpu_custom_call.1} parent=1 // pred_fallthru
      _
    // Predicated region
    $region26: #{tpu_custom_call.1} parent=1 // pred_check
      _
    $region27: #{tpu_custom_call.1} parent=1 // pred_check_branch
      %47 = sbr.rel (0) target = $region29
    $region28: #{tpu_custom_call.1} parent=1 // pred_region
      _
    $region29: #{tpu_custom_call.1} parent=1 // pred_fallthru
      _
    // Predicated region
    $region30: #{tpu_custom_call.1} parent=1 // pred_check
      _
    $region31: #{tpu_custom_call.1} parent=1 // pred_check_branch
      %49 = sbr.rel (0) target = $region33
    $region32: #{tpu_custom_call.1} parent=1 // pred_region
      _
    $region33: #{tpu_custom_call.1} parent=1 // pred_fallthru
      _
    // Predicated region
    $region34: #{tpu_custom_call.1} parent=1 // pred_check
      _
    $region35: #{tpu_custom_call.1} parent=1 // pred_check_branch
      %51 = sbr.rel (0) target = $region37
    $region36: #{tpu_custom_call.1} parent=1 // pred_region
      _
    $region37: #{tpu_custom_call.1} parent=1 // pred_fallthru
      _
    // Predicated region
    $region38: #{tpu_custom_call.1} parent=1 // pred_check
      _
    $region39: #{tpu_custom_call.1} parent=1 // pred_check_branch
      %53 = sbr.rel (0) target = $region41
    $region40: #{tpu_custom_call.1} parent=1 // pred_region
      _
    $region41: #{tpu_custom_call.1} parent=1 // pred_fallthru
      _
    // Predicated region
    $region42: #{tpu_custom_call.1} parent=1 // pred_check
      _
    $region43: #{tpu_custom_call.1} parent=1 // pred_check_branch
      %55 = sbr.rel (0) target = $region45
    $region44: #{tpu_custom_call.1} parent=1 // pred_region
      %56 = dma.done [#allocation4], 128
    $region45: #{tpu_custom_call.1} parent=1 // pred_fallthru
      _
    // Predicated region
    $region46: #{tpu_custom_call.1} parent=1 // pred_check
      _
    $region47: #{tpu_custom_call.1} parent=1 // pred_check_branch
      %58 = sbr.rel (0) target = $region49
    $region48: #{tpu_custom_call.1} parent=1 // pred_region
      %59 = dma.done [#allocation6], 128
    $region49: #{tpu_custom_call.1} parent=1 // pred_fallthru
      _
    %v60 = vld [vmem:[#allocation3] sm:$0xff]
    %v61 = vld [vmem:[#allocation5] sm:$0xff]
    %v62 = vld [vmem:[%s4] sm:$0xff]
    %v63 = vld [vmem:[%s4 + $0x8] sm:$0xff]
    %v64 = vld [vmem:[%s4 + $0x10] sm:$0xff]
    %v65 = vld [vmem:[%s4 + $0x18] sm:$0xff]
    %v66 = vld [vmem:[%s5] sm:$0x1]
    %v67 = vld [vmem:[%s6] sm:$0x1]
    %v68 = vld [vmem:[%s2] sm:$0xff]
    %70 = vset.pattern.permute.xlu0 0
    %71 = vperm.xlu0 %70, %v68
    %v72 = vpop.permute.xlu0 %71
    %v75 = vlaneseq
    %v76 = vshrl.u32 %v75, 7
    %v77 = vsub.s32 0, %v76
    %v78 = vrot.slane %v66, %v77
    %v80 = vmul.f32 %v72, %v78
    %vm81 = vcmask 261120
    %v83 = vsel %vm81, %v60, 0
    %85 = vmatprep.subr.mxu0 0.0
    %86 = vmatpush1.msra.mxu0 %v62
    %87 = vmatprep.subr.mxu0 0.0
    %88 = vmatpush1.msra.mxu0 %v63
    %89 = vmatprep.subr.mxu0 0.0
    %90 = vmatpush1.msra.mxu0 %v64
    %91 = vmatprep.subr.mxu0 0.0
    %92 = vmatpush1.msra.mxu0 %v65
    %93 = vmatprep.subr.mxu0 0.0
    %94 = vmatpush1.msra.mxu0 0.0
    %95 = vmatprep.subr.mxu0 0.0
    %96 = vmatpush1.msra.mxu0 0.0
    %97 = vmatprep.subr.mxu0 0.0
    %98 = vmatpush1.msra.mxu0 0.0
    %99 = vmatprep.subr.mxu0 0.0
    %100 = vmatpush1.msra.mxu0 0.0
    %101 = vmatprep.subr.mxu0 0.0
    %102 = vmatpush1.msra.mxu0 0.0
    %103 = vmatprep.subr.mxu0 0.0
    %104 = vmatpush1.msra.mxu0 0.0
    %105 = vmatprep.subr.mxu0 0.0
    %106 = vmatpush1.msra.mxu0 0.0
    %107 = vmatprep.subr.mxu0 0.0
    %108 = vmatpush1.msra.mxu0 0.0
    %109 = vmatprep.subr.mxu0 0.0
    %110 = vmatpush1.msra.mxu0 0.0
    %111 = vmatprep.subr.mxu0 0.0
    %112 = vmatpush1.msra.mxu0 0.0
    %113 = vmatprep.subr.mxu0 0.0
    %114 = vmatpush1.msra.mxu0 0.0
    %115 = vmatprep.subr.mxu0 0.0
    %116 = vmatpush1.msra.mxu0 0.0
    %117 = vmatprep.subr.mxu0 0.0
    %118 = vmatpush1.msra.mxu0 0.0
    %119 = vmatprep.subr.mxu0 0.0
    %120 = vmatpush1.msra.mxu0 0.0
    %121 = vmatprep.subr.mxu0 0.0
    %122 = vmatpush1.msra.mxu0 0.0
    %123 = vmatprep.subr.mxu0 0.0
    %124 = vmatpush1.msra.mxu0 0.0
    %125 = vmatprep.subr.mxu0 0.0
    %126 = vmatpush1.msra.mxu0 0.0
    %127 = vmatprep.subr.mxu0 0.0
    %128 = vmatpush1.msra.mxu0 0.0
    %129 = vmatprep.subr.mxu0 0.0
    %130 = vmatpush1.msra.mxu0 0.0
    %131 = vmatprep.subr.mxu0 0.0
    %132 = vmatpush1.msra.mxu0 0.0
    %133 = vmatprep.subr.mxu0 0.0
    %134 = vmatpush1.msra.mxu0 0.0
    %135 = vmatprep.subr.mxu0 0.0
    %136 = vmatpush1.msra.mxu0 0.0
    %137 = vmatprep.subr.mxu0 0.0
    %138 = vmatpush1.msra.mxu0 0.0
    %139 = vmatprep.subr.mxu0 0.0
    %140 = vmatpush1.msra.mxu0 0.0
    %141 = vmatprep.subr.mxu0 0.0
    %142 = vmatpush1.msra.mxu0 0.0
    %143 = vmatprep.subr.mxu0 0.0
    %144 = vmatpush1.msra.mxu0 0.0
    %145 = vmatprep.subr.mxu0 0.0
    %146 = vmatpush1.msra.mxu0 0.0
    %147 = vmatprep.subr.mxu0 0.0
    %148 = vmatpush1.msra.mxu0 0.0
    %149 = vmatprep.mubr.f32.mxu0 0.0
    %150 = vmatmul.mubr.f32.gmra.mrb[0].mxu0 %v83
    %v151 = vpop.f32.mrb[0].mxu0
    %v152 = vadd.f32 %v80, %v151
    %v153 = vpop.f32.mrb[0].mxu0
    %154 = vdwg.mxu0
    %v156 = vlaneseq
    %v157 = vshrl.u32 %v156, 7
    %v158 = vsub.s32 0, %v157
    %v159 = vrot.slane %v67, %v158
    %v161 = vadd.f32 %v152, %v159
    %v162 = vld [vmem:[%s3] sm:$0xff]
    %164 = vset.pattern.permute.xlu0 0
    %165 = vperm.xlu0 %164, %v162
    %v166 = vpop.permute.xlu0 %165
    %v168 = vmul.f32 %v166, %v78
    %v170 = vsel %vm81, %v61, 0
    %172 = vmatprep.subr.mxu0 0.0
    %173 = vmatpush1.msra.mxu0 %v62
    %174 = vmatprep.subr.mxu0 0.0
    %175 = vmatpush1.msra.mxu0 %v63
    %176 = vmatprep.subr.mxu0 0.0
    %177 = vmatpush1.msra.mxu0 %v64
    %178 = vmatprep.subr.mxu0 0.0
    %179 = vmatpush1.msra.mxu0 %v65
    %180 = vmatprep.subr.mxu0 0.0
    %181 = vmatpush1.msra.mxu0 0.0
    %182 = vmatprep.subr.mxu0 0.0
    %183 = vmatpush1.msra.mxu0 0.0
    %184 = vmatprep.subr.mxu0 0.0
    %185 = vmatpush1.msra.mxu0 0.0
    %186 = vmatprep.subr.mxu0 0.0
    %187 = vmatpush1.msra.mxu0 0.0
    %188 = vmatprep.subr.mxu0 0.0
    %189 = vmatpush1.msra.mxu0 0.0
    %190 = vmatprep.subr.mxu0 0.0
    %191 = vmatpush1.msra.mxu0 0.0
    %192 = vmatprep.subr.mxu0 0.0
    %193 = vmatpush1.msra.mxu0 0.0
    %194 = vmatprep.subr.mxu0 0.0
    %195 = vmatpush1.msra.mxu0 0.0
    %196 = vmatprep.subr.mxu0 0.0
    %197 = vmatpush1.msra.mxu0 0.0
    %198 = vmatprep.subr.mxu0 0.0
    %199 = vmatpush1.msra.mxu0 0.0
    %200 = vmatprep.subr.mxu0 0.0
    %201 = vmatpush1.msra.mxu0 0.0
    %202 = vmatprep.subr.mxu0 0.0
    %203 = vmatpush1.msra.mxu0 0.0
    %204 = vmatprep.subr.mxu0 0.0
    %205 = vmatpush1.msra.mxu0 0.0
    %206 = vmatprep.subr.mxu0 0.0
    %207 = vmatpush1.msra.mxu0 0.0
    %208 = vmatprep.subr.mxu0 0.0
    %209 = vmatpush1.msra.mxu0 0.0
    %210 = vmatprep.subr.mxu0 0.0
    %211 = vmatpush1.msra.mxu0 0.0
    %212 = vmatprep.subr.mxu0 0.0
    %213 = vmatpush1.msra.mxu0 0.0
    %214 = vmatprep.subr.mxu0 0.0
    %215 = vmatpush1.msra.mxu0 0.0
    %216 = vmatprep.subr.mxu0 0.0
    %217 = vmatpush1.msra.mxu0 0.0
    %218 = vmatprep.subr.mxu0 0.0
    %219 = vmatpush1.msra.mxu0 0.0
    %220 = vmatprep.subr.mxu0 0.0
    %221 = vmatpush1.msra.mxu0 0.0
    %222 = vmatprep.subr.mxu0 0.0
    %223 = vmatpush1.msra.mxu0 0.0
    %224 = vmatprep.subr.mxu0 0.0
    %225 = vmatpush1.msra.mxu0 0.0
    %226 = vmatprep.subr.mxu0 0.0
    %227 = vmatpush1.msra.mxu0 0.0
    %228 = vmatprep.subr.mxu0 0.0
    %229 = vmatpush1.msra.mxu0 0.0
    %230 = vmatprep.subr.mxu0 0.0
    %231 = vmatpush1.msra.mxu0 0.0
    %232 = vmatprep.subr.mxu0 0.0
    %233 = vmatpush1.msra.mxu0 0.0
    %234 = vmatprep.subr.mxu0 0.0
    %235 = vmatpush1.msra.mxu0 0.0
    %236 = vmatprep.mubr.f32.mxu0 0.0
    %237 = vmatmul.mubr.f32.gmra.mrb[0].mxu0 %v170
    %v238 = vpop.f32.mrb[0].mxu0
    %v239 = vadd.f32 %v168, %v238
    %v240 = vpop.f32.mrb[0].mxu0
    %241 = vdwg.mxu0
    %v242 = vadd.f32 %v239, %v159
    %v243 = vmax.f32 %v161, 0.0
    %v244 = vmax.f32 %v242, 0.0
    %v245 = vld [vmem:[%s7] sm:$0x1]
    %v247 = vlaneseq
    %v248 = vshrl.u32 %v247, 7
    %v249 = vsub.s32 0, %v248
    %v250 = vrot.slane %v245, %v249
    %v252 = vmul.f32 %v243, %v250
    %v253 = vld [vmem:[%s8] sm:$0x1]
    %v255 = vlaneseq
    %v256 = vshrl.u32 %v255, 7
    %v257 = vsub.s32 0, %v256
    %v258 = vrot.slane %v253, %v257
    %v260 = vmul.f32 %v244, %v258
    %v261 = vadd.f32 %v252, %v260
    %v262 = vsel %vm81, %v261, 0.0
    %263 = vadd.xlane.f32.xlu0 %v262
    %v264 = vpop.xlane.xlu0 %263
    %s265 = sld [smem:[#allocation2]]
    %v266 = vstv %s265
    %v267 = vadd.f32 %v264, %v266
    %vm268 = vcmask 7168
    %269 = vst.msk [vmem:[%s10] sm:$0xff] %vm268, %v267
    // Predicated region
    $region50: #{tpu_custom_call.1} parent=1 // pred_check
      _
    $region51: #{tpu_custom_call.1} parent=1 // pred_check_branch
      %271 = sbr.rel (0) target = $region53
    $region52: #{tpu_custom_call.1} parent=1 // pred_region
      _
    $region53: #{tpu_custom_call.1} parent=1 // pred_fallthru
      _
    // Predicated region
    $region54: #{tpu_custom_call.1} parent=1 // pred_check
      _
    $region55: #{tpu_custom_call.1} parent=1 // pred_check_branch
      %273 = sbr.rel (0) target = $region57
    $region56: #{tpu_custom_call.1} parent=1 // pred_region
      _
    $region57: #{tpu_custom_call.1} parent=1 // pred_fallthru
      _
    %274 = vsyncpa [#allocation4], 1
    %275 = vsyncpa [#allocation6], 1

</llo_original>
